<compile_context>
chip_gen: v7x
topology: tpu7x:2x2x1
jax: 0.10.0
libtpu: 0.0.40
codegen_flags: <defaults>
</compile_context>

<pallas_src>
import functools

import jax
import jax.numpy as jnp
from jax.experimental import pallas as pl
from jax.experimental.pallas import tpu as pltpu

NEG_SLOPE = 0.01          # F.leaky_relu default negative_slope
NEG_INF = -1e30           # f32-safe mask value

# Matmul operand dtype. jnp.bfloat16 doubles MXU throughput on v6e/v7x
# (at ~1e-3 relative error); keep float32 for validation against the f32
# reference and on v5e (whose VPU/EUP have no bf16 path).
MATMUL_DTYPE = jnp.float32

# Explicit scoped-VMEM budget (<= default on v5e/v6e/v7x); the tile caps below
# are sized well inside it (adj int8 tile 256x512 = 128 KiB per buffer).
VMEM_LIMIT_BYTES = 32 * 1024 * 1024


# --------------------------- kernel A: projection ---------------------------
def _proj_kernel(h_ref, w_ref, a_ref, z_ref, s_ref):
    """z = h @ W_all (heads stacked on the lane axis); s = z @ A_blk -> [rows, 2H]."""
    h = h_ref[...].astype(MATMUL_DTYPE)
    w = w_ref[...].astype(MATMUL_DTYPE)
    z = jnp.dot(h, w, preferred_element_type=jnp.float32)          # [rows, H*Fout]
    z_ref[...] = z
    # attention scores via one small MXU matmul (cols 0..H-1 = dst, H..2H-1 = src)
    s_ref[...] = jnp.dot(z.astype(MATMUL_DTYPE), a_ref[...].astype(MATMUL_DTYPE),
                         preferred_element_type=jnp.float32)        # [rows, 2H]


# ------------------ kernel B: flash-style masked softmax --------------------
def _attn_kernel(sdst_ref, ssrcT_ref, z_ref, adj_ref, out_ref,
                 m_sc, l_sc, acc_sc, *, num_heads, out_dim):
    j = pl.program_id(1)                       # src-block (reduction) axis

    @pl.when(j == 0)
    def _init():
        m_sc[...] = jnp.full_like(m_sc, NEG_INF)
        l_sc[...] = jnp.zeros_like(l_sc)
        acc_sc[...] = jnp.zeros_like(acc_sc)

    # adjacency streamed as int8; single compare -> mask reused by both selects
    valid = adj_ref[...].astype(jnp.float32) > 0.0     # [td, ts]
    s_dst = sdst_ref[...]                              # [td, H]
    s_srcT = ssrcT_ref[...]                            # [H, ts]
    z_src = z_ref[...]                                 # [ts, H*Fout]

    for hd in range(num_heads):                        # static unroll (H is tiny)
        col = slice(hd * out_dim, (hd + 1) * out_dim)
        # e[v, u] = leaky_relu(a_dst.z_v + a_src.z_u), masked off-graph
        e = s_dst[:, hd:hd + 1] + s_srcT[hd:hd + 1, :]              # [td, ts]
        e = jnp.where(e > 0, e, NEG_SLOPE * e)
        e = jnp.where(valid, e, NEG_INF)
        # online softmax accumulation over src blocks
        m_old = m_sc[hd]                                            # [td, 1]
        m_new = jnp.maximum(m_old, jnp.max(e, axis=-1, keepdims=True))
        scale = jnp.exp(m_old - m_new)
        p = jnp.where(valid, jnp.exp(e - m_new), 0.0)               # [td, ts]
        l_sc[hd] = scale * l_sc[hd] + jnp.sum(p, axis=-1, keepdims=True)
        acc_sc[hd] = scale * acc_sc[hd] + jnp.dot(
            p.astype(MATMUL_DTYPE), z_src[:, col].astype(MATMUL_DTYPE),
            preferred_element_type=jnp.float32)
        m_sc[hd] = m_new

    @pl.when(j == pl.num_programs(1) - 1)
    def _finalize():
        for hd in range(num_heads):
            col = slice(hd * out_dim, (hd + 1) * out_dim)
            # Fold normalization into the output. Exact divide on [td,1] is tiny;
            # pl.reciprocal(approx=True) would break the 1e-4 validation tolerance.
            inv = 1.0 / jnp.maximum(l_sc[hd], 1e-38)    # guard zero in-degree rows
            out_ref[:, col] = (acc_sc[hd] * inv).astype(out_ref.dtype)


# ------------------------------- wrappers ------------------------------------
def _pick_tile(n, cap):
    """Largest legal tile <= cap along a dim of size n (must divide n)."""
    if n <= cap:
        return n
    t = cap - cap % 128
    while t >= 128:
        if n % t == 0:
            return t
        t -= 128
    return n        # fall back to the full dimension (always a legal block)


def gat_multihead_layer(h, adj_i8, w, a_src, a_dst):
    """One MultiHeadGATLayer with merge='cat'. Returns lane-dense [N, H*Fout]."""
    H, Fin, Fout = w.shape
    N = h.shape[0]
    HF = H * Fout

    # Feature-stack per-head projections: W_all[:, h*Fout:(h+1)*Fout] = W[h]
    w_all = jnp.transpose(w, (1, 0, 2)).reshape(Fin, HF)
    # Block-diagonal attention projection: columns 0..H-1 -> dst scores,
    # columns H..2H-1 -> src scores.
    a_blk = jnp.zeros((HF, 2 * H), jnp.float32)
    for hd in range(H):
        a_blk = a_blk.at[hd * Fout:(hd + 1) * Fout, hd].set(a_dst[hd, 0])
        a_blk = a_blk.at[hd * Fout:(hd + 1) * Fout, H + hd].set(a_src[hd, 0])

    # ---- kernel A: head-stacked projection + attention scores ----
    tr = _pick_tile(N, 512)
    z, s = pl.pallas_call(
        _proj_kernel,
        out_shape=(jax.ShapeDtypeStruct((N, HF), jnp.float32),
                   jax.ShapeDtypeStruct((N, 2 * H), jnp.float32)),
        grid_spec=pltpu.PrefetchScalarGridSpec(
            num_scalar_prefetch=0,
            grid=(N // tr,),
            in_specs=[
                pl.BlockSpec((tr, Fin), lambda i: (i, 0)),
                pl.BlockSpec((Fin, HF), lambda i: (0, 0)),
                pl.BlockSpec((HF, 2 * H), lambda i: (0, 0)),
            ],
            out_specs=[
                pl.BlockSpec((tr, HF), lambda i: (i, 0)),
                pl.BlockSpec((tr, 2 * H), lambda i: (i, 0)),
            ],
        ),
        compiler_params=pltpu.CompilerParams(
            dimension_semantics=("parallel",),
            vmem_limit_bytes=VMEM_LIMIT_BYTES),
    )(h, w_all, a_blk)

    s_dst = s[:, :H]                   # [N, H]
    s_srcT = s[:, H:].T                # [H, N]  (tiny; src scores along lanes)

    # ---- kernel B: flash-style masked softmax + aggregation ----
    td = _pick_tile(N, 256)            # dst rows per block ("parallel")
    ts = _pick_tile(N, 512)            # src cols per block ("arbitrary" reduction)
    kernel = functools.partial(_attn_kernel, num_heads=H, out_dim=Fout)
    out = pl.pallas_call(
        kernel,
        out_shape=jax.ShapeDtypeStruct((N, HF), jnp.float32),
        grid_spec=pltpu.PrefetchScalarGridSpec(
            num_scalar_prefetch=0,
            grid=(N // td, N // ts),
            in_specs=[
                pl.BlockSpec((td, H), lambda i, j: (i, 0)),    # s_dst: resident per row block
                pl.BlockSpec((H, ts), lambda i, j: (0, j)),    # s_src^T: src stream
                pl.BlockSpec((ts, HF), lambda i, j: (j, 0)),   # z: src stream
                pl.BlockSpec((td, ts), lambda i, j: (i, j)),   # adj int8: the only big stream
            ],
            out_specs=pl.BlockSpec((td, HF), lambda i, j: (i, 0)),
            scratch_shapes=[
                pltpu.VMEM((H, td, 1), jnp.float32),      # running max
                pltpu.VMEM((H, td, 1), jnp.float32),      # running denominator
                pltpu.VMEM((H, td, Fout), jnp.float32),   # running output accumulator
            ],
        ),
        compiler_params=pltpu.CompilerParams(
            dimension_semantics=("parallel", "arbitrary"),
            vmem_limit_bytes=VMEM_LIMIT_BYTES),
    )(s_dst, s_srcT, z, adj_i8)
    return out                          # already [N, H*Fout]; no wrapper transpose


def gat_forward(h, adj, params):
    # adjacency only used as a >0 mask: stream it as int8 (4x less HBM/VMEM).
    adj_i8 = (adj > 0).astype(jnp.int8)
    h1 = gat_multihead_layer(h, adj_i8, params["w1"], params["a1_src"], params["a1_dst"])
    h1 = jax.nn.elu(h1)                 # F.elu between layers (tiny elementwise, left to XLA)
    h2 = gat_multihead_layer(h1, adj_i8, params["w2"], params["a2_src"], params["a2_dst"])
    return h2


# ---------------- pure-JAX reference for verification ----------------
def _ref_layer(h, adj, w, a_src, a_dst):
    outs = []
    for hd in range(w.shape[0]):
        z = h @ w[hd]
        s_src = z @ a_src[hd, 0]
        s_dst = z @ a_dst[hd, 0]
        e = s_dst[:, None] + s_src[None, :]
        e = jnp.where(e > 0, e, NEG_SLOPE * e)
        e = jnp.where(adj > 0, e, -jnp.inf)
        alpha = jax.nn.softmax(e, axis=-1)
        outs.append(alpha @ z)
    return jnp.concatenate(outs, axis=1)


def _ref_forward(h, adj, params):
    h1 = _ref_layer(h, adj, params["w1"], params["a1_src"], params["a1_dst"])
    h1 = jax.nn.elu(h1)
    return _ref_layer(h1, adj, params["w2"], params["a2_src"], params["a2_dst"])


if __name__ == "__main__":
    # Small synthetic problem consistent with GAT(g, in_dim, hidden_dim, out_dim, num_heads)
    N = 8
    in_dim = 16
    hidden_dim = 8
    out_dim = 4
    num_heads = 2

    key = jax.random.PRNGKey(0)
    k_h, k_w1, k_a1, k_w2, k_a2 = jax.random.split(key, 5)

    h = jax.random.normal(k_h, (N, in_dim), dtype=jnp.float32)

    # Graph: self-loops + a ring (every node has in-degree >= 1, as DGL softmax requires)
    import numpy as np
    adj_np = np.zeros((N, N), dtype=np.float32)
    for i in range(N):
        adj_np[i, i] = 1.0                 # self-loop
        adj_np[(i + 1) % N, i] = 1.0       # edge i -> i+1
        adj_np[(i + 3) % N, i] = 1.0       # edge i -> i+3
    adj = jnp.asarray(adj_np)

    params = {
        "w1": 0.2 * jax.random.normal(k_w1, (num_heads, in_dim, hidden_dim), jnp.float32),
        "a1_src": 0.2 * jax.random.normal(k_a1, (num_heads, 1, hidden_dim), jnp.float32),
        "a1_dst": 0.2 * jax.random.normal(jax.random.fold_in(k_a1, 1),
                                          (num_heads, 1, hidden_dim), jnp.float32),
        "w2": 0.2 * jax.random.normal(k_w2, (1, hidden_dim * num_heads, out_dim), jnp.float32),
        "a2_src": 0.2 * jax.random.normal(k_a2, (1, 1, out_dim), jnp.float32),
        "a2_dst": 0.2 * jax.random.normal(jax.random.fold_in(k_a2, 1),
                                          (1, 1, out_dim), jnp.float32),
    }

    out = jax.block_until_ready(gat_forward(h, adj, params))
    ref = jax.block_until_ready(_ref_forward(h, adj, params))

    assert out.shape == (N, out_dim), out.shape
    assert jnp.allclose(out, ref, atol=1e-4, rtol=1e-4), "mismatch vs pure-JAX reference"

    print("KERNEL_OK")
</pallas_src>

<mosaic_0001>
module attributes {stable_mosaic.version = 11 : i64} {
  func.func @_proj_kernel(%arg0: i32, %arg1: memref<8x16xf32, #tpu.memory_space<vmem>>, %arg2: memref<16x16xf32, #tpu.memory_space<vmem>>, %arg3: memref<16x4xf32, #tpu.memory_space<vmem>>, %arg4: memref<8x16xf32, #tpu.memory_space<vmem>>, %arg5: memref<8x4xf32, #tpu.memory_space<vmem>>) attributes {dimension_semantics = [#tpu.dimension_semantics<parallel>], iteration_bounds = array<i64: 1>, scalar_prefetch = 0 : i64, scratch_operands = 0 : i64, tpu.core_type = #tpu.core_type<tc>, window_params = [{transform_indices = @transform_0, window_bounds = array<i64: 8, 16>}, {pipeline_mode = #tpu.pipeline_mode<synchronous>, transform_indices = @transform_1, window_bounds = array<i64: 16, 16>}, {pipeline_mode = #tpu.pipeline_mode<synchronous>, transform_indices = @transform_2, window_bounds = array<i64: 16, 4>}, {transform_indices = @transform_3, window_bounds = array<i64: 8, 16>}, {transform_indices = @transform_4, window_bounds = array<i64: 8, 4>}]} {
    %c0 = arith.constant 0 : index
    %c0_0 = arith.constant 0 : index
    %0 = vector.load %arg1[%c0, %c0_0] : memref<8x16xf32, #tpu.memory_space<vmem>>, vector<8x16xf32>
    %c0_1 = arith.constant 0 : index
    %c0_2 = arith.constant 0 : index
    %1 = vector.load %arg2[%c0_1, %c0_2] : memref<16x16xf32, #tpu.memory_space<vmem>>, vector<16x16xf32>
    %cst = arith.constant dense<0.000000e+00> : vector<8x16xf32>
    %2 = tpu.matmul %0, %1, %cst {dimension_numbers = #tpu.dot_dimension_numbers<[1], [0], [0], [1], [0, 0, 1, 1], [], []>} : vector<8x16xf32>, vector<16x16xf32>, vector<8x16xf32> -> vector<8x16xf32>
    %c0_3 = arith.constant 0 : index
    %c0_4 = arith.constant 0 : index
    %3 = vector.load %arg4[%c0_3, %c0_4] : memref<8x16xf32, #tpu.memory_space<vmem>>, vector<8x16xf32>
    tpu.vector_store %arg4[%c0_3, %c0_4], %2 {strides = array<i32>} : memref<8x16xf32, #tpu.memory_space<vmem>>, vector<8x16xf32>,
    %c0_5 = arith.constant 0 : index
    %c0_6 = arith.constant 0 : index
    %4 = vector.load %arg3[%c0_5, %c0_6] : memref<16x4xf32, #tpu.memory_space<vmem>>, vector<16x4xf32>
    %cst_7 = arith.constant dense<0.000000e+00> : vector<8x4xf32>
    %5 = tpu.matmul %2, %4, %cst_7 {dimension_numbers = #tpu.dot_dimension_numbers<[1], [0], [0], [1], [0, 0, 1, 1], [], []>} : vector<8x16xf32>, vector<16x4xf32>, vector<8x4xf32> -> vector<8x4xf32>
    %c0_8 = arith.constant 0 : index
    %c0_9 = arith.constant 0 : index
    %6 = vector.load %arg5[%c0_8, %c0_9] : memref<8x4xf32, #tpu.memory_space<vmem>>, vector<8x4xf32>
    tpu.vector_store %arg5[%c0_8, %c0_9], %5 {strides = array<i32>} : memref<8x4xf32, #tpu.memory_space<vmem>>, vector<8x4xf32>,
    return
  }
  func.func @transform_0(%arg0: i32) -> (i32, i32) {
    %c0_i32 = arith.constant 0 : i32
    %c0_i32_0 = arith.constant 0 : i32
    return %arg0, %c0_i32 : i32, i32
  }
  func.func @transform_1(%arg0: i32) -> (i32, i32) {
    %c0_i32 = arith.constant 0 : i32
    %c0_i32_0 = arith.constant 0 : i32
    %c0_i32_1 = arith.constant 0 : i32
    return %c0_i32, %c0_i32_0 : i32, i32
  }
  func.func @transform_2(%arg0: i32) -> (i32, i32) {
    %c0_i32 = arith.constant 0 : i32
    %c0_i32_0 = arith.constant 0 : i32
    %c0_i32_1 = arith.constant 0 : i32
    return %c0_i32, %c0_i32_0 : i32, i32
  }
  func.func @transform_3(%arg0: i32) -> (i32, i32) {
    %c0_i32 = arith.constant 0 : i32
    %c0_i32_0 = arith.constant 0 : i32
    return %arg0, %c0_i32 : i32, i32
  }
  func.func @transform_4(%arg0: i32) -> (i32, i32) {
    %c0_i32 = arith.constant 0 : i32
    %c0_i32_0 = arith.constant 0 : i32
    return %arg0, %c0_i32 : i32, i32
  }
}

</mosaic_0001>

<llo_original>
// kernel: tpu_custom_call.1
$region0: #{tpu_custom_call.1}
  #allocation0 [shape = 'u32[]', space=smem, size = 0x4, offset = 0x4, fixed_abs, tag = 'smem constant byte address 0x4 - core index']
  #allocation1 [shape = 'u32[144,128]{1,0:T(1,128)}', space=vmem, size = 0x12000, scoped, tag = 'internal scratch']
  %s0 = inlined_call_operand.hbm [shape: f32[8,16], index: 0, kind: input, shape index: {}]
  %s1 = inlined_call_operand.vmem [shape: f32[16,16], index: 1, kind: input, shape index: {}]
  %s2 = inlined_call_operand.vmem [shape: f32[16,4], index: 2, kind: input, shape index: {}]
  %s3 = inlined_call_operand.hbm [shape: f32[8,16], index: 3, kind: output, shape index: {0}]
  %s4 = inlined_call_operand.vmem [shape: f32[8,4], index: 4, kind: output, shape index: {1}]
  %5 = xla_tuple %s3, %s4
  %s6 = sld [smem:[#allocation0]]
  $region34: #{tpu_custom_call.1} parent=0
    _
  %s8 = ssub.s32 1, %s6
  %s9 = scalar_select 0, %s8, %s6
  $region1: #{tpu_custom_call.1} parent=0
    #allocation2 [shape = 'u8[4096]{0}', space=vmem, size = 0x1000, scoped, tag = 'input window, operand 0, single buffered']
    #allocation3 [shape = 's32[1]{0}', space=sflag, size = 0x4, scoped, tag = 'scoped memory for tpu_custom_call.1']
    #allocation4 [shape = 's32[1]{0}', space=sflag, size = 0x4, scoped, tag = 'scoped memory for tpu_custom_call.1']
    #allocation5 [shape = 'u8[4096]{0}', space=vmem, size = 0x1000, scoped, tag = 'output window, operand 0, single buffered']
    %10 = vsyncpa [#allocation3], 0
    %11 = vsyncpa [#allocation4], 0
    // Predicated region
    $region2: #{tpu_custom_call.1} parent=1 // pred_check
      _
    $region3: #{tpu_custom_call.1} parent=1 // pred_check_branch
      %13 = sbr.rel (0) target = $region5
    $region4: #{tpu_custom_call.1} parent=1 // pred_region
      %s15 = ssub.s32 128, 128
      %16 = vsyncadd [#allocation3], %s15
      %s18 = sshll.u32 [#allocation2], 4
      %s19 = int_to_ptr.vmem [resolvable:$true] %s18
      %21 = dma.hbm_to_vmem [thread:$0]  %s0, 128, %s19, [#allocation3]
    $region5: #{tpu_custom_call.1} parent=1 // pred_fallthru
      _
    // Predicated region
    $region6: #{tpu_custom_call.1} parent=1 // pred_check
      _
    $region7: #{tpu_custom_call.1} parent=1 // pred_check_branch
      %23 = sbr.rel (0) target = $region9
    $region8: #{tpu_custom_call.1} parent=1 // pred_region
      _
    $region9: #{tpu_custom_call.1} parent=1 // pred_fallthru
      _
    // Predicated region
    $region10: #{tpu_custom_call.1} parent=1 // pred_check
      _
    $region11: #{tpu_custom_call.1} parent=1 // pred_check_branch
      %25 = sbr.rel (0) target = $region13
    $region12: #{tpu_custom_call.1} parent=1 // pred_region
      _
    $region13: #{tpu_custom_call.1} parent=1 // pred_fallthru
      _
    // Predicated region
    $region14: #{tpu_custom_call.1} parent=1 // pred_check
      _
    $region15: #{tpu_custom_call.1} parent=1 // pred_check_branch
      %27 = sbr.rel (0) target = $region17
    $region16: #{tpu_custom_call.1} parent=1 // pred_region
      %28 = dma.done [#allocation3], 128
    $region17: #{tpu_custom_call.1} parent=1 // pred_fallthru
      _
    %v29 = vld [vmem:[#allocation2] sm:$0xff]
    %v30 = vld [vmem:[%s1] sm:$0xff]
    %v31 = vld [vmem:[%s1 + $0x8] sm:$0xff]
    %vm32 = vcmask 130048
    %v34 = vsel %vm32, %v29, 0
    %36 = vmatprep.subr.mxu0 0.0
    %37 = vmatpush1.msra.mxu0 %v30
    %38 = vmatprep.subr.mxu0 0.0
    %39 = vmatpush1.msra.mxu0 %v31
    %40 = vmatprep.subr.mxu0 0.0
    %41 = vmatpush1.msra.mxu0 0.0
    %42 = vmatprep.subr.mxu0 0.0
    %43 = vmatpush1.msra.mxu0 0.0
    %44 = vmatprep.subr.mxu0 0.0
    %45 = vmatpush1.msra.mxu0 0.0
    %46 = vmatprep.subr.mxu0 0.0
    %47 = vmatpush1.msra.mxu0 0.0
    %48 = vmatprep.subr.mxu0 0.0
    %49 = vmatpush1.msra.mxu0 0.0
    %50 = vmatprep.subr.mxu0 0.0
    %51 = vmatpush1.msra.mxu0 0.0
    %52 = vmatprep.subr.mxu0 0.0
    %53 = vmatpush1.msra.mxu0 0.0
    %54 = vmatprep.subr.mxu0 0.0
    %55 = vmatpush1.msra.mxu0 0.0
    %56 = vmatprep.subr.mxu0 0.0
    %57 = vmatpush1.msra.mxu0 0.0
    %58 = vmatprep.subr.mxu0 0.0
    %59 = vmatpush1.msra.mxu0 0.0
    %60 = vmatprep.subr.mxu0 0.0
    %61 = vmatpush1.msra.mxu0 0.0
    %62 = vmatprep.subr.mxu0 0.0
    %63 = vmatpush1.msra.mxu0 0.0
    %64 = vmatprep.subr.mxu0 0.0
    %65 = vmatpush1.msra.mxu0 0.0
    %66 = vmatprep.subr.mxu0 0.0
    %67 = vmatpush1.msra.mxu0 0.0
    %68 = vmatprep.subr.mxu0 0.0
    %69 = vmatpush1.msra.mxu0 0.0
    %70 = vmatprep.subr.mxu0 0.0
    %71 = vmatpush1.msra.mxu0 0.0
    %72 = vmatprep.subr.mxu0 0.0
    %73 = vmatpush1.msra.mxu0 0.0
    %74 = vmatprep.subr.mxu0 0.0
    %75 = vmatpush1.msra.mxu0 0.0
    %76 = vmatprep.subr.mxu0 0.0
    %77 = vmatpush1.msra.mxu0 0.0
    %78 = vmatprep.subr.mxu0 0.0
    %79 = vmatpush1.msra.mxu0 0.0
    %80 = vmatprep.subr.mxu0 0.0
    %81 = vmatpush1.msra.mxu0 0.0
    %82 = vmatprep.subr.mxu0 0.0
    %83 = vmatpush1.msra.mxu0 0.0
    %84 = vmatprep.subr.mxu0 0.0
    %85 = vmatpush1.msra.mxu0 0.0
    %86 = vmatprep.subr.mxu0 0.0
    %87 = vmatpush1.msra.mxu0 0.0
    %88 = vmatprep.subr.mxu0 0.0
    %89 = vmatpush1.msra.mxu0 0.0
    %90 = vmatprep.subr.mxu0 0.0
    %91 = vmatpush1.msra.mxu0 0.0
    %92 = vmatprep.subr.mxu0 0.0
    %93 = vmatpush1.msra.mxu0 0.0
    %94 = vmatprep.subr.mxu0 0.0
    %95 = vmatpush1.msra.mxu0 0.0
    %96 = vmatprep.subr.mxu0 0.0
    %97 = vmatpush1.msra.mxu0 0.0
    %98 = vmatprep.subr.mxu0 0.0
    %99 = vmatpush1.msra.mxu0 0.0
    %100 = vmatprep.mubr.f32.mxu0 0.0
    %101 = vmatmul.mubr.f32.gmra.mrb[0].mxu0 %v34
    %v102 = vpop.f32.mrb[0].mxu0
    %v103 = vadd.f32 0.0, %v102
    %v104 = vpop.f32.mrb[0].mxu0
    %105 = vdwg.mxu0
    %106 = vst.msk [vmem:[#allocation5] sm:$0xff] %vm32, %v103
    %v107 = vld [vmem:[%s2] sm:$0xff]
    %v108 = vld [vmem:[%s2 + $0x8] sm:$0xff]
    %v110 = vsel %vm32, %v103, 0
    %112 = vmatprep.subr.mxu0 0.0
    %113 = vmatpush1.msra.mxu0 %v107
    %114 = vmatprep.subr.mxu0 0.0
    %115 = vmatpush1.msra.mxu0 %v108
    %116 = vmatprep.subr.mxu0 0.0
    %117 = vmatpush1.msra.mxu0 0.0
    %118 = vmatprep.subr.mxu0 0.0
    %119 = vmatpush1.msra.mxu0 0.0
    %120 = vmatprep.subr.mxu0 0.0
    %121 = vmatpush1.msra.mxu0 0.0
    %122 = vmatprep.subr.mxu0 0.0
    %123 = vmatpush1.msra.mxu0 0.0
    %124 = vmatprep.subr.mxu0 0.0
    %125 = vmatpush1.msra.mxu0 0.0
    %126 = vmatprep.subr.mxu0 0.0
    %127 = vmatpush1.msra.mxu0 0.0
    %128 = vmatprep.subr.mxu0 0.0
    %129 = vmatpush1.msra.mxu0 0.0
    %130 = vmatprep.subr.mxu0 0.0
    %131 = vmatpush1.msra.mxu0 0.0
    %132 = vmatprep.subr.mxu0 0.0
    %133 = vmatpush1.msra.mxu0 0.0
    %134 = vmatprep.subr.mxu0 0.0
    %135 = vmatpush1.msra.mxu0 0.0
    %136 = vmatprep.subr.mxu0 0.0
    %137 = vmatpush1.msra.mxu0 0.0
    %138 = vmatprep.subr.mxu0 0.0
    %139 = vmatpush1.msra.mxu0 0.0
    %140 = vmatprep.subr.mxu0 0.0
    %141 = vmatpush1.msra.mxu0 0.0
    %142 = vmatprep.subr.mxu0 0.0
    %143 = vmatpush1.msra.mxu0 0.0
    %144 = vmatprep.subr.mxu0 0.0
    %145 = vmatpush1.msra.mxu0 0.0
    %146 = vmatprep.subr.mxu0 0.0
    %147 = vmatpush1.msra.mxu0 0.0
    %148 = vmatprep.subr.mxu0 0.0
    %149 = vmatpush1.msra.mxu0 0.0
    %150 = vmatprep.subr.mxu0 0.0
    %151 = vmatpush1.msra.mxu0 0.0
    %152 = vmatprep.subr.mxu0 0.0
    %153 = vmatpush1.msra.mxu0 0.0
    %154 = vmatprep.subr.mxu0 0.0
    %155 = vmatpush1.msra.mxu0 0.0
    %156 = vmatprep.subr.mxu0 0.0
    %157 = vmatpush1.msra.mxu0 0.0
    %158 = vmatprep.subr.mxu0 0.0
    %159 = vmatpush1.msra.mxu0 0.0
    %160 = vmatprep.subr.mxu0 0.0
    %161 = vmatpush1.msra.mxu0 0.0
    %162 = vmatprep.subr.mxu0 0.0
    %163 = vmatpush1.msra.mxu0 0.0
    %164 = vmatprep.subr.mxu0 0.0
    %165 = vmatpush1.msra.mxu0 0.0
    %166 = vmatprep.subr.mxu0 0.0
    %167 = vmatpush1.msra.mxu0 0.0
    %168 = vmatprep.subr.mxu0 0.0
    %169 = vmatpush1.msra.mxu0 0.0
    %170 = vmatprep.subr.mxu0 0.0
    %171 = vmatpush1.msra.mxu0 0.0
    %172 = vmatprep.subr.mxu0 0.0
    %173 = vmatpush1.msra.mxu0 0.0
    %174 = vmatprep.subr.mxu0 0.0
    %175 = vmatpush1.msra.mxu0 0.0
    %176 = vmatprep.mubr.f32.mxu0 0.0
    %177 = vmatmul.mubr.f32.gmra.mrb[0].mxu0 %v110
    %v178 = vpop.f32.mrb[0].mxu0
    %v179 = vadd.f32 0.0, %v178
    %v180 = vpop.f32.mrb[0].mxu0
    %181 = vdwg.mxu0
    %vm182 = vcmask 31744
    %183 = vst.msk [vmem:[%s4] sm:$0xff] %vm182, %v179
    // Predicated region
    $region18: #{tpu_custom_call.1} parent=1 // pred_check
      _
    $region19: #{tpu_custom_call.1} parent=1 // pred_check_branch
      %185 = sbr.rel (0) target = $region21
    $region20: #{tpu_custom_call.1} parent=1 // pred_region
      %s187 = ssub.s32 128, 128
      %188 = vsyncadd [#allocation4], %s187
      %s190 = sshll.u32 [#allocation5], 4
      %s191 = int_to_ptr.vmem [resolvable:$true] %s190
      %193 = dma.vmem_to_hbm [thread:$0]  %s191, 128, %s3, [#allocation4]
    $region21: #{tpu_custom_call.1} parent=1 // pred_fallthru
      _
    // Predicated region
    $region22: #{tpu_custom_call.1} parent=1 // pred_check
      _
    $region23: #{tpu_custom_call.1} parent=1 // pred_check_branch
      %195 = sbr.rel (0) target = $region25
    $region24: #{tpu_custom_call.1} parent=1 // pred_region
      _
    $region25: #{tpu_custom_call.1} parent=1 // pred_fallthru
      _
    // Predicated region
    $region26: #{tpu_custom_call.1} parent=1 // pred_check
      _
    $region27: #{tpu_custom_call.1} parent=1 // pred_check_branch
      %197 = sbr.rel (0) target = $region29
    $region28: #{tpu_custom_call.1} parent=1 // pred_region
      %198 = dma.done [#allocation4], 128
    $region29: #{tpu_custom_call.1} parent=1 // pred_fallthru
      _
    // Predicated region
    $region30: #{tpu_custom_call.1} parent=1 // pred_check
      _
    $region31: #{tpu_custom_call.1} parent=1 // pred_check_branch
      %200 = sbr.rel (0) target = $region33
    $region32: #{tpu_custom_call.1} parent=1 // pred_region
      _
    $region33: #{tpu_custom_call.1} parent=1 // pred_fallthru
      _
    %201 = vsyncpa [#allocation3], 1
    %202 = vsyncpa [#allocation4], 1

</llo_original>
